<compile_context>
chip_gen: v7x
topology: tpu7x:2x2x1
jax: 0.10.0
libtpu: 0.0.40
codegen_flags: <defaults>
</compile_context>

<pallas_src>
import functools
import math

import jax
import jax.numpy as jnp
from jax.experimental import pallas as pl
from jax.experimental.pallas import tpu as pltpu

_SMALL_BYTES = 2 * 1024 * 1024  # below this: single gridless full-array block


def make_positional_table(d_model: int, max_seq_len: int = 100) -> jnp.ndarray:
    """Reproduces the exact double loop from PositionalEmbedding.__init__.

    pe[pos, i]   = sin(pos / 10000 ** (2 * i       / d_model))   (even i)
    pe[pos, i+1] = cos(pos / 10000 ** (2 * (i + 1) / d_model))
    Returns the table as (max_seq_len, d_model) float32.
    """
    pos = jnp.arange(max_seq_len, dtype=jnp.float32)[:, None]           # (L, 1)
    i_even = jnp.arange(0, d_model, 2, dtype=jnp.float32)[None, :]       # (1, D/2)
    sin_part = jnp.sin(pos / jnp.power(10000.0, 2.0 * i_even / d_model))
    cos_part = jnp.cos(pos / jnp.power(10000.0, 2.0 * (i_even + 1.0) / d_model))
    pe = jnp.stack([sin_part, cos_part], axis=-1).reshape(max_seq_len, d_model)
    return pe.astype(jnp.float32)


def _posemb_kernel(x_ref, pe_ref, o_ref, *, scale):
    # x_ref/o_ref: (tr, tc) lane-dense tiles. pe_ref: (1, tc) (broadcasts over
    # sublanes) or (tr, tc) (pre-tiled, matches row-for-row). One unmasked
    # store per output element on aligned shapes.
    x = x_ref[...].astype(jnp.float32)
    pe = pe_ref[...].astype(jnp.float32)
    o_ref[...] = (x * scale + pe).astype(o_ref.dtype)


def _vmem_capacity_bytes() -> int:
    try:
        return int(pltpu.get_tpu_info().vmem_capacity_bytes)
    except Exception:
        return 64 * 1024 * 1024  # conservative: v7x per-TensorCore VMEM


def _pick_fold(B: int, N: int) -> int:
    """Smallest g with (B*g) % 8 == 0, g | N and (N//g) % 128 == 0; else 1."""
    if B % 8 == 0:
        return 1
    base = 8 // math.gcd(B, 8)
    g = base
    while g <= min(N, 64):
        if N % g == 0 and (N // g) % 128 == 0:
            return g
        g += base
    return 1


def positional_embedding(x: jnp.ndarray, pe: jnp.ndarray, d_model: int) -> jnp.ndarray:
    """x: (B, S, D); pe: (max_seq_len, d_model) table. Returns x*sqrt(d)+pe[:S]."""
    B, S, D = x.shape
    assert D == d_model
    assert S <= pe.shape[0], "seq_len exceeds max_seq_len of the pe table"

    N = S * D
    scale = float(math.sqrt(d_model))
    itemsize = jnp.dtype(x.dtype).itemsize
    kernel = functools.partial(_posemb_kernel, scale=scale)

    pe_s = pe[:S, :]                                  # (S, D), cheap XLA slice

    # ---------- fast path: tiny tensors -> single full-array block ----------
    if B * N * itemsize <= _SMALL_BYTES:
        out2 = pl.pallas_call(
            kernel,
            out_shape=jax.ShapeDtypeStruct((B, N), x.dtype),
        )(x.reshape(B, N), pe_s.reshape(1, N))
        return out2.reshape(B, S, D)

    # ---------- general tiled path ----------
    g = _pick_fold(B, N)                              # fold factor for sublane fill
    R, C = B * g, N // g
    x2 = x.reshape(R, C)                              # row-major contiguous view
    pe_flat = pe_s.reshape(g, C)                      # same column space as x2

    vmem_cap = _vmem_capacity_bytes()
    target_block_bytes = min(8 * 1024 * 1024, max(1 * 1024 * 1024, vmem_cap // 10))

    # Row tile: full sublanes (multiple of 8) and whole folded batches (mult of g).
    if R % 8 == 0:
        row_unit = (g * 8) // math.gcd(g, 8)          # lcm(g, 8); divides R
        tr = min(R, max(row_unit, (256 // row_unit) * row_unit))
    else:
        row_unit = R
        tr = R                                        # full-extent block (legal)

    # Column tile: widest multiple of 128 within the byte budget, or full width.
    if C % 128 == 0:
        tc = min(C, max(128, (target_block_bytes // (tr * itemsize)) // 128 * 128))
    else:
        tc = C                                        # full-width block (legal)

    nr, nc = pl.cdiv(R, tr), pl.cdiv(C, tc)
    # v7x has 2 TensorCores: make sure a "parallel" axis has >= 2 blocks.
    if nr == 1 and nc == 1:
        if C % 256 == 0:
            tc, nc = C // 2, 2
        elif R % (2 * row_unit) == 0:
            tr, nr = R // 2, 2

    # pe operand: (1, C) broadcast when g == 1, else pre-tiled to the row tile
    # so the kernel's pe block matches the x block row-for-row.
    if g == 1:
        pe_b = pe_flat                                # (1, C)
    else:
        pe_b = jnp.tile(pe_flat, (tr // g, 1))        # (tr, C)
    n_pe_rows = pe_b.shape[0]

    # VMEM: double-buffered x + out + pe blocks, plus slack, capped by the chip.
    block_bytes = (2 * tr * tc + n_pe_rows * tc) * itemsize
    vmem_limit = int(min(max(2 * block_bytes + (4 << 20), 32 << 20),
                         max(vmem_cap - (8 << 20), 16 << 20)))

    out2 = pl.pallas_call(
        kernel,
        out_shape=jax.ShapeDtypeStruct((R, C), x.dtype),
        grid_spec=pltpu.PrefetchScalarGridSpec(
            num_scalar_prefetch=0,
            grid=(nc, nr),                            # rows innermost: pe stays resident
            in_specs=[
                pl.BlockSpec((tr, tc), lambda j, i: (i, j)),           # x tile
                pl.BlockSpec((n_pe_rows, tc), lambda j, i: (0, j)),    # pe tile
            ],
            out_specs=pl.BlockSpec((tr, tc), lambda j, i: (i, j)),
        ),
        compiler_params=pltpu.CompilerParams(
            dimension_semantics=("parallel", "parallel"),
            vmem_limit_bytes=vmem_limit,
        ),
        cost_estimate=pl.CostEstimate(
            flops=2 * R * C,
            transcendentals=0,
            bytes_accessed=(2 * R * C + n_pe_rows * C) * itemsize,
        ),
    )(x2, pe_b)
    return out2.reshape(B, S, D)


if __name__ == "__main__":
    key = jax.random.PRNGKey(0)
    k0, k1, k2 = jax.random.split(key, 3)

    # --- small-shape demo (matches the PyTorch module defaults) ---
    d_model, max_seq_len = 32, 100
    B, S = 2, 8
    x = jax.random.normal(k0, (B, S, d_model), dtype=jnp.float32)
    pe_tab = make_positional_table(d_model, max_seq_len)
    out = jax.block_until_ready(positional_embedding(x, pe_tab, d_model))
    ref = x * math.sqrt(d_model) + pe_tab[None, :S, :]
    assert out.shape == (B, S, d_model)
    assert jnp.allclose(out, ref, atol=1e-5, rtol=1e-5)

    # --- larger shape exercising the tiled general path (B % 8 == 0) ---
    d_model2, B2, S2 = 512, 16, 100
    x_big = jax.random.normal(k1, (B2, S2, d_model2), dtype=jnp.float32)
    pe_tab2 = make_positional_table(d_model2, 100)
    out_big = jax.block_until_ready(positional_embedding(x_big, pe_tab2, d_model2))
    ref_big = x_big * math.sqrt(d_model2) + pe_tab2[None, :S2, :]
    assert jnp.allclose(out_big, ref_big, atol=1e-4, rtol=1e-5)

    # --- small-batch large-model shape exercising the sublane-fold path ---
    d_model3, B3, S3 = 2048, 4, 100
    x_fold = jax.random.normal(k2, (B3, S3, d_model3), dtype=jnp.float32)
    pe_tab3 = make_positional_table(d_model3, 100)
    out_fold = jax.block_until_ready(positional_embedding(x_fold, pe_tab3, d_model3))
    ref_fold = x_fold * math.sqrt(d_model3) + pe_tab3[None, :S3, :]
    assert jnp.allclose(out_fold, ref_fold, atol=1e-4, rtol=1e-5)

    print("KERNEL_OK")
</pallas_src>

<mosaic_0001>
module attributes {stable_mosaic.version = 11 : i64} {
  func.func @_posemb_kernel(%arg0: memref<2x256xf32, #tpu.memory_space<vmem>>, %arg1: memref<1x256xf32, #tpu.memory_space<vmem>>, %arg2: memref<2x256xf32, #tpu.memory_space<vmem>>) attributes {dimension_semantics = [], scalar_prefetch = 0 : i64, scratch_operands = 0 : i64, tpu.core_type = #tpu.core_type<tc>} {
    %c0 = arith.constant 0 : index
    %c0_0 = arith.constant 0 : index
    %0 = vector.load %arg0[%c0, %c0_0] : memref<2x256xf32, #tpu.memory_space<vmem>>, vector<2x256xf32>
    %c0_1 = arith.constant 0 : index
    %c0_2 = arith.constant 0 : index
    %1 = vector.load %arg1[%c0_1, %c0_2] : memref<1x256xf32, #tpu.memory_space<vmem>>, vector<1x256xf32>
    %cst = arith.constant 5.65685415 : f32
    %2 = vector.broadcast %cst : f32 to vector<2x256xf32>
    %3 = arith.mulf %0, %2 : vector<2x256xf32>
    %4 = vector.broadcast %1 : vector<1x256xf32> to vector<2x256xf32>
    %5 = arith.addf %3, %4 : vector<2x256xf32>
    %c0_3 = arith.constant 0 : index
    %c0_4 = arith.constant 0 : index
    %6 = vector.load %arg2[%c0_3, %c0_4] : memref<2x256xf32, #tpu.memory_space<vmem>>, vector<2x256xf32>
    tpu.vector_store %arg2[%c0_3, %c0_4], %5 {strides = array<i32>} : memref<2x256xf32, #tpu.memory_space<vmem>>, vector<2x256xf32>,
    return
  }
}

</mosaic_0001>

<llo_original>
// kernel: tpu_custom_call.1
$region0: #{tpu_custom_call.1}
  #allocation0 [shape = 'u32[]', space=smem, size = 0x4, offset = 0x4, fixed_abs, tag = 'smem constant byte address 0x4 - core index']
  #allocation1 [shape = 'u32[144,128]{1,0:T(1,128)}', space=vmem, size = 0x12000, scoped, tag = 'internal scratch']
  %s0 = inlined_call_operand.hbm [shape: f32[2,256], index: 0, kind: input, shape index: {}]
  %s1 = inlined_call_operand.vmem [shape: f32[1,256], index: 1, kind: input, shape index: {}]
  %s2 = inlined_call_operand.hbm [shape: f32[2,256], index: 2, kind: output, shape index: {}]
  %s3 = sld [smem:[#allocation0]]
  $region22: #{tpu_custom_call.1} parent=0
    _
  %s5 = ssub.s32 1, %s3
  %s6 = scalar_select 0, %s5, %s3
  $region1: #{tpu_custom_call.1} parent=0
    #allocation2 [shape = 'u8[2048]{0}', space=vmem, size = 0x800, scoped, tag = 'input window, operand 0, single buffered']
    #allocation3 [shape = 's32[1]{0}', space=sflag, size = 0x4, scoped, tag = 'scoped memory for tpu_custom_call.1']
    #allocation4 [shape = 's32[1]{0}', space=sflag, size = 0x4, scoped, tag = 'scoped memory for tpu_custom_call.1']
    #allocation5 [shape = 'u8[2048]{0}', space=vmem, size = 0x800, scoped, tag = 'output window, operand 0, single buffered']
    %7 = vsyncpa [#allocation3], 0
    %8 = vsyncpa [#allocation4], 0
    // Predicated region
    $region2: #{tpu_custom_call.1} parent=1 // pred_check
      _
    $region3: #{tpu_custom_call.1} parent=1 // pred_check_branch
      %10 = sbr.rel (0) target = $region5
    $region4: #{tpu_custom_call.1} parent=1 // pred_region
      %s12 = ssub.s32 64, 64
      %13 = vsyncadd [#allocation3], %s12
      %s15 = sshll.u32 [#allocation2], 4
      %s16 = int_to_ptr.vmem [resolvable:$true] %s15
      %18 = dma.hbm_to_vmem [thread:$0]  %s0, 64, %s16, [#allocation3]
    $region5: #{tpu_custom_call.1} parent=1 // pred_fallthru
      _
    // Predicated region
    $region6: #{tpu_custom_call.1} parent=1 // pred_check
      _
    $region7: #{tpu_custom_call.1} parent=1 // pred_check_branch
      %20 = sbr.rel (0) target = $region9
    $region8: #{tpu_custom_call.1} parent=1 // pred_region
      _
    $region9: #{tpu_custom_call.1} parent=1 // pred_fallthru
      _
    // Predicated region
    $region10: #{tpu_custom_call.1} parent=1 // pred_check
      _
    $region11: #{tpu_custom_call.1} parent=1 // pred_check_branch
      %22 = sbr.rel (0) target = $region13
    $region12: #{tpu_custom_call.1} parent=1 // pred_region
      %23 = dma.done [#allocation3], 64
    $region13: #{tpu_custom_call.1} parent=1 // pred_fallthru
      _
    %v24 = vld [vmem:[#allocation2] sm:$0xf]
    %v25 = vld [vmem:[%s1] sm:$0x3]
    %v26 = vmul.f32 %v24, 5.656854
    %v28 = vlaneseq
    %v29 = vshrl.u32 %v28, 7
    %v30 = vsub.s32 0, %v29
    %v31 = vrot.slane %v25, %v30
    %v32 = vlaneseq
    %v33 = vshrl.u32 %v32, 7
    %v34 = vsub.s32 1, %v33
    %v35 = vrot.slane %v25, %v34
    %v36 = vcombine.low %v31, %v35
    %v38 = vunpack.c.l.s4 1983009808
    %v39 = vunpack.c.0.s8 %v38
    %v40 = vlaneseq
    %v41 = vshrl.u32 %v40, 7
    %v42 = vsub.s32 %v39, %v41
    %v43 = vrot.slane %v36, %v42
    %v45 = vadd.f32 %v26, %v43
    %46 = vst [vmem:[#allocation5] sm:$0xf] %v45
    // Predicated region
    $region14: #{tpu_custom_call.1} parent=1 // pred_check
      _
    $region15: #{tpu_custom_call.1} parent=1 // pred_check_branch
      %48 = sbr.rel (0) target = $region17
    $region16: #{tpu_custom_call.1} parent=1 // pred_region
      %s50 = ssub.s32 64, 64
      %51 = vsyncadd [#allocation4], %s50
      %s53 = sshll.u32 [#allocation5], 4
      %s54 = int_to_ptr.vmem [resolvable:$true] %s53
      %56 = dma.vmem_to_hbm [thread:$0]  %s54, 64, %s2, [#allocation4]
    $region17: #{tpu_custom_call.1} parent=1 // pred_fallthru
      _
    // Predicated region
    $region18: #{tpu_custom_call.1} parent=1 // pred_check
      _
    $region19: #{tpu_custom_call.1} parent=1 // pred_check_branch
      %58 = sbr.rel (0) target = $region21
    $region20: #{tpu_custom_call.1} parent=1 // pred_region
      %59 = dma.done [#allocation4], 64
    $region21: #{tpu_custom_call.1} parent=1 // pred_fallthru
      _
    %60 = vsyncpa [#allocation3], 1
    %61 = vsyncpa [#allocation4], 1

</llo_original>
